<compile_context>
chip_gen: v7x
topology: tpu7x:2x2x1
jax: 0.10.0
libtpu: 0.0.40
codegen_flags: <defaults>
</compile_context>

<pallas_src>
import jax
import jax.numpy as jnp
from jax.experimental import pallas as pl
from jax.experimental.pallas import tpu as pltpu


def _fusion_kernel(x1_ref, x2_ref, w1_ref, w2_ref, b_ref, o_ref):
    # Two MXU matmuls in natural [M,K] x [K,N] form, accumulated in f32.
    acc = jnp.dot(x1_ref[...], w1_ref[...], preferred_element_type=jnp.float32)
    acc = acc + jnp.dot(x2_ref[...], w2_ref[...],
                        preferred_element_type=jnp.float32)
    # Bias epilogue: single f32 VPU add, then cast to the output dtype.
    o_ref[...] = (acc + b_ref[...].astype(jnp.float32)).astype(o_ref.dtype)


def feature_fusion(x1, x2, weight, bias, *, tile_b_max=512):
    """x1, x2: (B, F).  weight: (F, 2F) (PyTorch nn.Linear layout).  bias: (F,)."""
    B, F = x1.shape
    assert x2.shape == (B, F)
    assert weight.shape == (F, 2 * F)
    assert bias.shape == (F,)

    # Wrapper-side layout plumbing: split + transpose the weight so the kernel
    # sees MXU-natural (K, N) operands.  Done once per call; negligible vs the
    # B*2F*F matmul and keeps the kernel free of transposes / slices.
    w1 = weight[:, :F].T          # (F_in, F_out) half consumed by x1
    w2 = weight[:, F:].T          # (F_in, F_out) half consumed by x2
    bias2d = bias.reshape(1, F)   # 2-D so it maps onto (sublane, lane)

    # Batch tile: full batch when small (block == full dim is always legal);
    # otherwise 512 rows (multiple of 8 sublanes, near the HBM-roofline knee).
    tile_b = B if B <= tile_b_max else tile_b_max
    grid = (pl.cdiv(B, tile_b),)

    # VMEM budget: double-buffered x1/x2/out batch tiles + resident weights
    # + f32 accumulator headroom.  Ask for an explicit limit with headroom,
    # clamped to [default 32 MiB, v7x physical 64 MiB].
    in_bytes = jnp.dtype(x1.dtype).itemsize
    w_bytes = jnp.dtype(weight.dtype).itemsize
    vmem_needed = (
        2 * 2 * tile_b * F * in_bytes        # x1, x2 tiles (double-buffered)
        + 2 * tile_b * F * in_bytes          # out tile (double-buffered)
        + 2 * F * F * w_bytes + F * w_bytes  # resident weight halves + bias
        + tile_b * F * 4                     # f32 accumulator headroom
    )
    vmem_limit = int(min(max(2 * vmem_needed, 32 * 1024 * 1024),
                         64 * 1024 * 1024))

    cost = pl.CostEstimate(
        flops=2 * B * (2 * F) * F,
        transcendentals=0,
        bytes_accessed=(3 * B * F * in_bytes          # x1, x2 in + y out
                        + 2 * F * F * w_bytes + F * w_bytes),
    )

    return pl.pallas_call(
        _fusion_kernel,
        out_shape=jax.ShapeDtypeStruct((B, F), x1.dtype),
        grid=grid,
        in_specs=[
            pl.BlockSpec((tile_b, F), lambda i: (i, 0)),  # x1 batch tile
            pl.BlockSpec((tile_b, F), lambda i: (i, 0)),  # x2 batch tile
            pl.BlockSpec((F, F), lambda i: (0, 0)),       # W half 1, resident
            pl.BlockSpec((F, F), lambda i: (0, 0)),       # W half 2, resident
            pl.BlockSpec((1, F), lambda i: (0, 0)),       # bias, resident
        ],
        out_specs=pl.BlockSpec((tile_b, F), lambda i: (i, 0)),
        compiler_params=pltpu.CompilerParams(
            dimension_semantics=("parallel",),  # megacore-shard batch tiles
            vmem_limit_bytes=vmem_limit,
        ),
        cost_estimate=cost,
    )(x1, x2, w1, w2, bias2d)


def _reference(x1, x2, weight, bias):
    x = jnp.concatenate([x1, x2], axis=1)
    return x @ weight.T + bias


if __name__ == "__main__":
    B = 2
    FEATURE_SIZE = 32
    # NOTE: at this toy size the op is launch-overhead bound; the tiling /
    # residency choices above matter at realistic B and F (multiples of 128).

    key = jax.random.PRNGKey(0)
    k1, k2, kw, kb = jax.random.split(key, 4)

    x1 = jax.random.normal(k1, (B, FEATURE_SIZE), dtype=jnp.float32)
    x2 = jax.random.normal(k2, (B, FEATURE_SIZE), dtype=jnp.float32)

    # Deterministic init mimicking nn.Linear's uniform(-1/sqrt(in), 1/sqrt(in)).
    fan_in = 2 * FEATURE_SIZE
    bound = 1.0 / (fan_in ** 0.5)
    weight = jax.random.uniform(
        kw, (FEATURE_SIZE, 2 * FEATURE_SIZE), minval=-bound, maxval=bound,
        dtype=jnp.float32)
    bias = jax.random.uniform(
        kb, (FEATURE_SIZE,), minval=-bound, maxval=bound, dtype=jnp.float32)

    out = feature_fusion(x1, x2, weight, bias)
    out = jax.block_until_ready(out)

    ref = _reference(x1, x2, weight, bias)
    assert out.shape == (B, FEATURE_SIZE)
    assert jnp.allclose(out, ref, atol=1e-5, rtol=1e-5), "mismatch vs reference"

    print("KERNEL_OK")
</pallas_src>

<mosaic_0001>
module attributes {stable_mosaic.version = 11 : i64} {
  func.func @_fusion_kernel(%arg0: i32, %arg1: memref<2x32xf32, #tpu.memory_space<vmem>>, %arg2: memref<2x32xf32, #tpu.memory_space<vmem>>, %arg3: memref<32x32xf32, #tpu.memory_space<vmem>>, %arg4: memref<32x32xf32, #tpu.memory_space<vmem>>, %arg5: memref<1x32xf32, #tpu.memory_space<vmem>>, %arg6: memref<2x32xf32, #tpu.memory_space<vmem>>) attributes {dimension_semantics = [#tpu.dimension_semantics<parallel>], iteration_bounds = array<i64: 1>, scalar_prefetch = 0 : i64, scratch_operands = 0 : i64, tpu.core_type = #tpu.core_type<tc>, window_params = [{transform_indices = @transform_0, window_bounds = array<i64: 2, 32>}, {transform_indices = @transform_1, window_bounds = array<i64: 2, 32>}, {pipeline_mode = #tpu.pipeline_mode<synchronous>, transform_indices = @transform_2, window_bounds = array<i64: 32, 32>}, {pipeline_mode = #tpu.pipeline_mode<synchronous>, transform_indices = @transform_3, window_bounds = array<i64: 32, 32>}, {pipeline_mode = #tpu.pipeline_mode<synchronous>, transform_indices = @transform_4, window_bounds = array<i64: 1, 32>}, {transform_indices = @transform_5, window_bounds = array<i64: 2, 32>}]} {
    %c0 = arith.constant 0 : index
    %c0_0 = arith.constant 0 : index
    %0 = vector.load %arg1[%c0, %c0_0] : memref<2x32xf32, #tpu.memory_space<vmem>>, vector<2x32xf32>
    %c0_1 = arith.constant 0 : index
    %c0_2 = arith.constant 0 : index
    %1 = vector.load %arg3[%c0_1, %c0_2] : memref<32x32xf32, #tpu.memory_space<vmem>>, vector<32x32xf32>
    %cst = arith.constant dense<0.000000e+00> : vector<2x32xf32>
    %2 = tpu.matmul %0, %1, %cst {dimension_numbers = #tpu.dot_dimension_numbers<[1], [0], [0], [1], [0, 0, 1, 1], [], []>} : vector<2x32xf32>, vector<32x32xf32>, vector<2x32xf32> -> vector<2x32xf32>
    %c0_3 = arith.constant 0 : index
    %c0_4 = arith.constant 0 : index
    %3 = vector.load %arg2[%c0_3, %c0_4] : memref<2x32xf32, #tpu.memory_space<vmem>>, vector<2x32xf32>
    %c0_5 = arith.constant 0 : index
    %c0_6 = arith.constant 0 : index
    %4 = vector.load %arg4[%c0_5, %c0_6] : memref<32x32xf32, #tpu.memory_space<vmem>>, vector<32x32xf32>
    %cst_7 = arith.constant dense<0.000000e+00> : vector<2x32xf32>
    %5 = tpu.matmul %3, %4, %cst_7 {dimension_numbers = #tpu.dot_dimension_numbers<[1], [0], [0], [1], [0, 0, 1, 1], [], []>} : vector<2x32xf32>, vector<32x32xf32>, vector<2x32xf32> -> vector<2x32xf32>
    %6 = arith.addf %2, %5 : vector<2x32xf32>
    %c0_8 = arith.constant 0 : index
    %c0_9 = arith.constant 0 : index
    %7 = vector.load %arg5[%c0_8, %c0_9] : memref<1x32xf32, #tpu.memory_space<vmem>>, vector<1x32xf32>
    %8 = vector.broadcast %7 : vector<1x32xf32> to vector<2x32xf32>
    %9 = arith.addf %6, %8 : vector<2x32xf32>
    %c0_10 = arith.constant 0 : index
    %c0_11 = arith.constant 0 : index
    %10 = vector.load %arg6[%c0_10, %c0_11] : memref<2x32xf32, #tpu.memory_space<vmem>>, vector<2x32xf32>
    tpu.vector_store %arg6[%c0_10, %c0_11], %9 {strides = array<i32>} : memref<2x32xf32, #tpu.memory_space<vmem>>, vector<2x32xf32>,
    return
  }
  func.func @transform_0(%arg0: i32) -> (i32, i32) {
    %c0_i32 = arith.constant 0 : i32
    %c0_i32_0 = arith.constant 0 : i32
    return %arg0, %c0_i32 : i32, i32
  }
  func.func @transform_1(%arg0: i32) -> (i32, i32) {
    %c0_i32 = arith.constant 0 : i32
    %c0_i32_0 = arith.constant 0 : i32
    return %arg0, %c0_i32 : i32, i32
  }
  func.func @transform_2(%arg0: i32) -> (i32, i32) {
    %c0_i32 = arith.constant 0 : i32
    %c0_i32_0 = arith.constant 0 : i32
    %c0_i32_1 = arith.constant 0 : i32
    return %c0_i32, %c0_i32_0 : i32, i32
  }
  func.func @transform_3(%arg0: i32) -> (i32, i32) {
    %c0_i32 = arith.constant 0 : i32
    %c0_i32_0 = arith.constant 0 : i32
    %c0_i32_1 = arith.constant 0 : i32
    return %c0_i32, %c0_i32_0 : i32, i32
  }
  func.func @transform_4(%arg0: i32) -> (i32, i32) {
    %c0_i32 = arith.constant 0 : i32
    %c0_i32_0 = arith.constant 0 : i32
    %c0_i32_1 = arith.constant 0 : i32
    return %c0_i32, %c0_i32_0 : i32, i32
  }
  func.func @transform_5(%arg0: i32) -> (i32, i32) {
    %c0_i32 = arith.constant 0 : i32
    %c0_i32_0 = arith.constant 0 : i32
    return %arg0, %c0_i32 : i32, i32
  }
}

</mosaic_0001>

<llo_original>
// kernel: tpu_custom_call.1
$region0: #{tpu_custom_call.1}
  #allocation0 [shape = 'u32[]', space=smem, size = 0x4, offset = 0x4, fixed_abs, tag = 'smem constant byte address 0x4 - core index']
  #allocation1 [shape = 'u32[144,128]{1,0:T(1,128)}', space=vmem, size = 0x12000, scoped, tag = 'internal scratch']
  %s0 = inlined_call_operand.hbm [shape: f32[2,32], index: 0, kind: input, shape index: {}]
  %s1 = inlined_call_operand.vmem [shape: f32[2,32], index: 1, kind: input, shape index: {}]
  %s2 = inlined_call_operand.hbm [shape: f32[32,32], index: 2, kind: input, shape index: {}]
  %s3 = inlined_call_operand.hbm [shape: f32[32,32], index: 3, kind: input, shape index: {}]
  %s4 = inlined_call_operand.vmem [shape: f32[1,32], index: 4, kind: input, shape index: {}]
  %s5 = inlined_call_operand.hbm [shape: f32[2,32], index: 5, kind: output, shape index: {}]
  %s6 = sld [smem:[#allocation0]]
  $region42: #{tpu_custom_call.1} parent=0
    _
  %s8 = ssub.s32 1, %s6
  %s9 = scalar_select 0, %s8, %s6
  $region1: #{tpu_custom_call.1} parent=0
    #allocation2 [shape = 'u8[1024]{0}', space=vmem, size = 0x400, scoped, tag = 'input window, operand 0, single buffered']
    #allocation3 [shape = 's32[1]{0}', space=sflag, size = 0x4, scoped, tag = 'scoped memory for tpu_custom_call.1']
    #allocation4 [shape = 's32[1]{0}', space=sflag, size = 0x4, scoped, tag = 'scoped memory for tpu_custom_call.1']
    #allocation5 [shape = 'u8[16384]{0}', space=vmem, size = 0x4000, scoped, tag = 'input window, operand 2, single buffered']
    #allocation6 [shape = 's32[1]{0}', space=sflag, size = 0x4, scoped, tag = 'scoped memory for tpu_custom_call.1']
    #allocation7 [shape = 'u8[16384]{0}', space=vmem, size = 0x4000, scoped, tag = 'input window, operand 3, single buffered']
    #allocation8 [shape = 'u8[1024]{0}', space=vmem, size = 0x400, scoped, tag = 'output window, operand 0, single buffered']
    %10 = vsyncpa [#allocation3], 0
    %11 = vsyncpa [#allocation6], 0
    %12 = vsyncpa [#allocation4], 0
    // Predicated region
    $region2: #{tpu_custom_call.1} parent=1 // pred_check
      _
    $region3: #{tpu_custom_call.1} parent=1 // pred_check_branch
      %14 = sbr.rel (0) target = $region5
    $region4: #{tpu_custom_call.1} parent=1 // pred_region
      %s16 = ssub.s32 32, 32
      %17 = vsyncadd [#allocation3], %s16
      %s19 = sshll.u32 [#allocation2], 4
      %s20 = int_to_ptr.vmem [resolvable:$true] %s19
      %22 = dma.hbm_to_vmem [thread:$0]  %s0, 32, %s20, [#allocation3]
    $region5: #{tpu_custom_call.1} parent=1 // pred_fallthru
      _
    // Predicated region
    $region6: #{tpu_custom_call.1} parent=1 // pred_check
      _
    $region7: #{tpu_custom_call.1} parent=1 // pred_check_branch
      %24 = sbr.rel (0) target = $region9
    $region8: #{tpu_custom_call.1} parent=1 // pred_region
      _
    $region9: #{tpu_custom_call.1} parent=1 // pred_fallthru
      _
    // Predicated region
    $region10: #{tpu_custom_call.1} parent=1 // pred_check
      _
    $region11: #{tpu_custom_call.1} parent=1 // pred_check_branch
      %26 = sbr.rel (0) target = $region13
    $region12: #{tpu_custom_call.1} parent=1 // pred_region
      %s28 = ssub.s32 512, 512
      %29 = vsyncadd [#allocation6], %s28
      %s30 = sshll.u32 [#allocation5], 4
      %s31 = int_to_ptr.vmem [resolvable:$true] %s30
      %36 = dma.hbm_to_vmem [thread:$0]  %s2, 512, %s31, [#allocation6], 128, 128, 8
    $region13: #{tpu_custom_call.1} parent=1 // pred_fallthru
      _
    // Predicated region
    $region14: #{tpu_custom_call.1} parent=1 // pred_check
      _
    $region15: #{tpu_custom_call.1} parent=1 // pred_check_branch
      %38 = sbr.rel (0) target = $region17
    $region16: #{tpu_custom_call.1} parent=1 // pred_region
      %s40 = ssub.s32 512, 512
      %41 = vsyncadd [#allocation6], %s40
      %s42 = sshll.u32 [#allocation7], 4
      %s43 = int_to_ptr.vmem [resolvable:$true] %s42
      %48 = dma.hbm_to_vmem [thread:$0]  %s3, 512, %s43, [#allocation6], 128, 128, 8
    $region17: #{tpu_custom_call.1} parent=1 // pred_fallthru
      _
    // Predicated region
    $region18: #{tpu_custom_call.1} parent=1 // pred_check
      _
    $region19: #{tpu_custom_call.1} parent=1 // pred_check_branch
      %50 = sbr.rel (0) target = $region21
    $region20: #{tpu_custom_call.1} parent=1 // pred_region
      _
    $region21: #{tpu_custom_call.1} parent=1 // pred_fallthru
      _
    // Predicated region
    $region22: #{tpu_custom_call.1} parent=1 // pred_check
      _
    $region23: #{tpu_custom_call.1} parent=1 // pred_check_branch
      %52 = sbr.rel (0) target = $region25
    $region24: #{tpu_custom_call.1} parent=1 // pred_region
      %53 = dma.done [#allocation3], 32
    $region25: #{tpu_custom_call.1} parent=1 // pred_fallthru
      _
    // Predicated region
    $region26: #{tpu_custom_call.1} parent=1 // pred_check
      _
    $region27: #{tpu_custom_call.1} parent=1 // pred_check_branch
      %55 = sbr.rel (0) target = $region29
    $region28: #{tpu_custom_call.1} parent=1 // pred_region
      %56 = dma.done [#allocation6], 512
    $region29: #{tpu_custom_call.1} parent=1 // pred_fallthru
      _
    // Predicated region
    $region30: #{tpu_custom_call.1} parent=1 // pred_check
      _
    $region31: #{tpu_custom_call.1} parent=1 // pred_check_branch
      %58 = sbr.rel (0) target = $region33
    $region32: #{tpu_custom_call.1} parent=1 // pred_region
      %59 = dma.done [#allocation6], 512
    $region33: #{tpu_custom_call.1} parent=1 // pred_fallthru
      _
    %v60 = vld [vmem:[#allocation2] sm:$0x3]
    %v61 = vld [vmem:[#allocation5] sm:$0xff]
    %v62 = vld [vmem:[#allocation5 + $0x8] sm:$0xff]
    %v63 = vld [vmem:[#allocation5 + $0x10] sm:$0xff]
    %v64 = vld [vmem:[#allocation5 + $0x18] sm:$0xff]
    %v65 = vld [vmem:[%s1] sm:$0x3]
    %v66 = vld [vmem:[#allocation7] sm:$0xff]
    %v67 = vld [vmem:[#allocation7 + $0x8] sm:$0xff]
    %v68 = vld [vmem:[#allocation7 + $0x10] sm:$0xff]
    %v69 = vld [vmem:[#allocation7 + $0x18] sm:$0xff]
    %vm70 = vcmask 261120
    %v72 = vsel %vm70, %v65, 0
    %74 = vmatprep.subr.mxu0 0.0
    %75 = vmatpush1.msra.mxu0 %v66
    %76 = vmatprep.subr.mxu0 0.0
    %77 = vmatpush1.msra.mxu0 %v67
    %78 = vmatprep.subr.mxu0 0.0
    %79 = vmatpush1.msra.mxu0 %v68
    %80 = vmatprep.subr.mxu0 0.0
    %81 = vmatpush1.msra.mxu0 %v69
    %82 = vmatprep.subr.mxu0 0.0
    %83 = vmatpush1.msra.mxu0 0.0
    %84 = vmatprep.subr.mxu0 0.0
    %85 = vmatpush1.msra.mxu0 0.0
    %86 = vmatprep.subr.mxu0 0.0
    %87 = vmatpush1.msra.mxu0 0.0
    %88 = vmatprep.subr.mxu0 0.0
    %89 = vmatpush1.msra.mxu0 0.0
    %90 = vmatprep.subr.mxu0 0.0
    %91 = vmatpush1.msra.mxu0 0.0
    %92 = vmatprep.subr.mxu0 0.0
    %93 = vmatpush1.msra.mxu0 0.0
    %94 = vmatprep.subr.mxu0 0.0
    %95 = vmatpush1.msra.mxu0 0.0
    %96 = vmatprep.subr.mxu0 0.0
    %97 = vmatpush1.msra.mxu0 0.0
    %98 = vmatprep.subr.mxu0 0.0
    %99 = vmatpush1.msra.mxu0 0.0
    %100 = vmatprep.subr.mxu0 0.0
    %101 = vmatpush1.msra.mxu0 0.0
    %102 = vmatprep.subr.mxu0 0.0
    %103 = vmatpush1.msra.mxu0 0.0
    %104 = vmatprep.subr.mxu0 0.0
    %105 = vmatpush1.msra.mxu0 0.0
    %106 = vmatprep.subr.mxu0 0.0
    %107 = vmatpush1.msra.mxu0 0.0
    %108 = vmatprep.subr.mxu0 0.0
    %109 = vmatpush1.msra.mxu0 0.0
    %110 = vmatprep.subr.mxu0 0.0
    %111 = vmatpush1.msra.mxu0 0.0
    %112 = vmatprep.subr.mxu0 0.0
    %113 = vmatpush1.msra.mxu0 0.0
    %114 = vmatprep.subr.mxu0 0.0
    %115 = vmatpush1.msra.mxu0 0.0
    %116 = vmatprep.subr.mxu0 0.0
    %117 = vmatpush1.msra.mxu0 0.0
    %118 = vmatprep.subr.mxu0 0.0
    %119 = vmatpush1.msra.mxu0 0.0
    %120 = vmatprep.subr.mxu0 0.0
    %121 = vmatpush1.msra.mxu0 0.0
    %122 = vmatprep.subr.mxu0 0.0
    %123 = vmatpush1.msra.mxu0 0.0
    %124 = vmatprep.subr.mxu0 0.0
    %125 = vmatpush1.msra.mxu0 0.0
    %126 = vmatprep.subr.mxu0 0.0
    %127 = vmatpush1.msra.mxu0 0.0
    %128 = vmatprep.subr.mxu0 0.0
    %129 = vmatpush1.msra.mxu0 0.0
    %130 = vmatprep.subr.mxu0 0.0
    %131 = vmatpush1.msra.mxu0 0.0
    %132 = vmatprep.subr.mxu0 0.0
    %133 = vmatpush1.msra.mxu0 0.0
    %134 = vmatprep.subr.mxu0 0.0
    %135 = vmatpush1.msra.mxu0 0.0
    %136 = vmatprep.subr.mxu0 0.0
    %137 = vmatpush1.msra.mxu0 0.0
    %138 = vmatprep.mubr.f32.mxu0 0.0
    %139 = vmatmul.mubr.f32.gmra.mrb[0].mxu0 %v72
    %v140 = vpop.f32.mrb[0].mxu0
    %v141 = vadd.f32 0.0, %v140
    %v142 = vpop.f32.mrb[0].mxu0
    %143 = vdwg.mxu0
    %v145 = vsel %vm70, %v60, 0
    %147 = vmatprep.subr.mxu0 0.0
    %148 = vmatpush1.msra.mxu0 %v61
    %149 = vmatprep.subr.mxu0 0.0
    %150 = vmatpush1.msra.mxu0 %v62
    %151 = vmatprep.subr.mxu0 0.0
    %152 = vmatpush1.msra.mxu0 %v63
    %153 = vmatprep.subr.mxu0 0.0
    %154 = vmatpush1.msra.mxu0 %v64
    %155 = vmatprep.subr.mxu0 0.0
    %156 = vmatpush1.msra.mxu0 0.0
    %157 = vmatprep.subr.mxu0 0.0
    %158 = vmatpush1.msra.mxu0 0.0
    %159 = vmatprep.subr.mxu0 0.0
    %160 = vmatpush1.msra.mxu0 0.0
    %161 = vmatprep.subr.mxu0 0.0
    %162 = vmatpush1.msra.mxu0 0.0
    %163 = vmatprep.subr.mxu0 0.0
    %164 = vmatpush1.msra.mxu0 0.0
    %165 = vmatprep.subr.mxu0 0.0
    %166 = vmatpush1.msra.mxu0 0.0
    %167 = vmatprep.subr.mxu0 0.0
    %168 = vmatpush1.msra.mxu0 0.0
    %169 = vmatprep.subr.mxu0 0.0
    %170 = vmatpush1.msra.mxu0 0.0
    %171 = vmatprep.subr.mxu0 0.0
    %172 = vmatpush1.msra.mxu0 0.0
    %173 = vmatprep.subr.mxu0 0.0
    %174 = vmatpush1.msra.mxu0 0.0
    %175 = vmatprep.subr.mxu0 0.0
    %176 = vmatpush1.msra.mxu0 0.0
    %177 = vmatprep.subr.mxu0 0.0
    %178 = vmatpush1.msra.mxu0 0.0
    %179 = vmatprep.subr.mxu0 0.0
    %180 = vmatpush1.msra.mxu0 0.0
    %181 = vmatprep.subr.mxu0 0.0
    %182 = vmatpush1.msra.mxu0 0.0
    %183 = vmatprep.subr.mxu0 0.0
    %184 = vmatpush1.msra.mxu0 0.0
    %185 = vmatprep.subr.mxu0 0.0
    %186 = vmatpush1.msra.mxu0 0.0
    %187 = vmatprep.subr.mxu0 0.0
    %188 = vmatpush1.msra.mxu0 0.0
    %189 = vmatprep.subr.mxu0 0.0
    %190 = vmatpush1.msra.mxu0 0.0
    %191 = vmatprep.subr.mxu0 0.0
    %192 = vmatpush1.msra.mxu0 0.0
    %193 = vmatprep.subr.mxu0 0.0
    %194 = vmatpush1.msra.mxu0 0.0
    %195 = vmatprep.subr.mxu0 0.0
    %196 = vmatpush1.msra.mxu0 0.0
    %197 = vmatprep.subr.mxu0 0.0
    %198 = vmatpush1.msra.mxu0 0.0
    %199 = vmatprep.subr.mxu0 0.0
    %200 = vmatpush1.msra.mxu0 0.0
    %201 = vmatprep.subr.mxu0 0.0
    %202 = vmatpush1.msra.mxu0 0.0
    %203 = vmatprep.subr.mxu0 0.0
    %204 = vmatpush1.msra.mxu0 0.0
    %205 = vmatprep.subr.mxu0 0.0
    %206 = vmatpush1.msra.mxu0 0.0
    %207 = vmatprep.subr.mxu0 0.0
    %208 = vmatpush1.msra.mxu0 0.0
    %209 = vmatprep.subr.mxu0 0.0
    %210 = vmatpush1.msra.mxu0 0.0
    %211 = vmatprep.mubr.f32.mxu0 0.0
    %212 = vmatmul.mubr.f32.gmra.mrb[0].mxu0 %v145
    %v213 = vpop.f32.mrb[0].mxu0
    %v214 = vadd.f32 %v141, %v213
    %v215 = vpop.f32.mrb[0].mxu0
    %216 = vdwg.mxu0
    %v217 = vld [vmem:[%s4] sm:$0x1]
    %v219 = vlaneseq
    %v220 = vshrl.u32 %v219, 7
    %v221 = vsub.s32 0, %v220
    %v222 = vrot.slane %v217, %v221
    %v224 = vadd.f32 %v214, %v222
    %vm225 = vcmask 254976
    %226 = vst.msk [vmem:[#allocation8] sm:$0x3] %vm225, %v224
    // Predicated region
    $region34: #{tpu_custom_call.1} parent=1 // pred_check
      _
    $region35: #{tpu_custom_call.1} parent=1 // pred_check_branch
      %228 = sbr.rel (0) target = $region37
    $region36: #{tpu_custom_call.1} parent=1 // pred_region
      %s230 = ssub.s32 32, 32
      %231 = vsyncadd [#allocation4], %s230
      %s233 = sshll.u32 [#allocation8], 4
      %s234 = int_to_ptr.vmem [resolvable:$true] %s233
      %236 = dma.vmem_to_hbm [thread:$0]  %s234, 32, %s5, [#allocation4]
    $region37: #{tpu_custom_call.1} parent=1 // pred_fallthru
      _
    // Predicated region
    $region38: #{tpu_custom_call.1} parent=1 // pred_check
      _
    $region39: #{tpu_custom_call.1} parent=1 // pred_check_branch
      %238 = sbr.rel (0) target = $region41
    $region40: #{tpu_custom_call.1} parent=1 // pred_region
      %239 = dma.done [#allocation4], 32
    $region41: #{tpu_custom_call.1} parent=1 // pred_fallthru
      _
    %240 = vsyncpa [#allocation3], 1
    %241 = vsyncpa [#allocation6], 1
    %242 = vsyncpa [#allocation4], 1

</llo_original>
